<compile_context>
chip_gen: v6e
topology: v6e:2x2x1
jax: 0.10.0
libtpu: 0.0.40
codegen_flags: <defaults>
</compile_context>

<pallas_src>
import math

import jax
import jax.numpy as jnp
from jax.experimental import pallas as pl
from jax.experimental.pallas import tpu as pltpu

IN_FEATURES = 111
OUT_FEATURES = 24

# Default row-tile size.  ~4 MiB lane-padded input tile (x2 buffers) + ~4 MiB
# output tile (x2 buffers) ≈ 16 MiB VMEM -> needs the 32 MiB scoped limit set
# explicitly (v5e's default is 16 MiB), safe on all generations.
TM_DEFAULT = 8192
VMEM_LIMIT_BYTES = 32 << 20


def _round_up(x, n):
    return ((x + n - 1) // n) * n


def _linear_kernel(x_ref, w_ref, b_ref, o_ref):
    # x_ref: (TM, 111)  w_ref: (111, 24)  b_ref: (1, 24)  o_ref: (TM, 24)
    acc = jnp.dot(x_ref[...], w_ref[...], preferred_element_type=jnp.float32)
    o_ref[...] = (acc + b_ref[...]).astype(o_ref.dtype)


def mlp_skinner_forward(dvm, weight, bias, *, tm=TM_DEFAULT):
    """Pallas equivalent of MLP_skinner.forward.

    dvm:    (..., 111)  float32
    weight: (24, 111)   float32  (PyTorch nn.Linear layout)
    bias:   (24,)       float32
    returns (..., 24)   float32
    """
    assert dvm.shape[-1] == IN_FEATURES
    lead = dvm.shape[:-1]
    m = int(math.prod(lead)) if lead else 1

    x2d = dvm.reshape(m, IN_FEATURES)
    w_t = weight.T.astype(dvm.dtype)                 # (111, 24), resident in VMEM
    b2d = bias.reshape(1, OUT_FEATURES).astype(dvm.dtype)

    # Row tile: multiple of 8 (sublane rule); clamp to the (8-rounded) row
    # count for small inputs so a single tile never vastly exceeds the array.
    tm_eff = _round_up(min(tm, _round_up(m, 8)), 8)

    # No padding of M: Pallas masks the ragged final block's stores; the
    # garbage rows it computes are never written back nor consumed.
    grid = (pl.cdiv(m, tm_eff),)

    cost = pl.CostEstimate(
        flops=2 * m * IN_FEATURES * OUT_FEATURES,
        transcendentals=0,
        bytes_accessed=4 * (m * IN_FEATURES + m * OUT_FEATURES
                            + IN_FEATURES * OUT_FEATURES + OUT_FEATURES),
    )

    out2d = pl.pallas_call(
        _linear_kernel,
        out_shape=jax.ShapeDtypeStruct((m, OUT_FEATURES), dvm.dtype),
        grid=grid,
        in_specs=[
            pl.BlockSpec((tm_eff, IN_FEATURES), lambda i: (i, 0)),        # streamed
            pl.BlockSpec((IN_FEATURES, OUT_FEATURES), lambda i: (0, 0)),  # resident
            pl.BlockSpec((1, OUT_FEATURES), lambda i: (0, 0)),            # resident
        ],
        out_specs=pl.BlockSpec((tm_eff, OUT_FEATURES), lambda i: (i, 0)),
        compiler_params=pltpu.CompilerParams(
            dimension_semantics=("parallel",),
            vmem_limit_bytes=VMEM_LIMIT_BYTES,
        ),
        cost_estimate=cost,
    )(x2d, w_t, b2d)

    return out2d.reshape(*lead, OUT_FEATURES)


def init_params(key):
    """Deterministic init matching nn.Linear(111, 24) parameter shapes."""
    kw, kb = jax.random.split(key)
    bound = 1.0 / math.sqrt(IN_FEATURES)
    weight = jax.random.uniform(
        kw, (OUT_FEATURES, IN_FEATURES), jnp.float32, minval=-bound, maxval=bound
    )
    bias = jax.random.uniform(
        kb, (OUT_FEATURES,), jnp.float32, minval=-bound, maxval=bound
    )
    return weight, bias


if __name__ == "__main__":
    key = jax.random.PRNGKey(0)
    k_in, k_param = jax.random.split(key)

    # Small input consistent with the module: dvm is (..., 111); use (batch=2, seq=8, 111).
    dvm = jax.random.normal(k_in, (2, 8, IN_FEATURES), jnp.float32)
    weight, bias = init_params(k_param)

    out = mlp_skinner_forward(dvm, weight, bias)
    out = jax.block_until_ready(out)

    # Reference check in plain JAX (same math as torch's y = x @ W^T + b).
    ref = dvm @ weight.T + bias
    assert out.shape == (2, 8, OUT_FEATURES)
    assert jnp.allclose(out, ref, atol=1e-4, rtol=1e-4)

    # Exercise the multi-tile + ragged-final-block path (M not a multiple of TM):
    # 3 * 6890 = 20670 rows -> 3 grid steps at TM=8192, last block partial.
    dvm_big = jax.random.normal(k_in, (3, 6890, IN_FEATURES), jnp.float32)
    out_big = jax.block_until_ready(mlp_skinner_forward(dvm_big, weight, bias))
    ref_big = dvm_big @ weight.T + bias
    assert out_big.shape == (3, 6890, OUT_FEATURES)
    assert jnp.allclose(out_big, ref_big, atol=1e-4, rtol=1e-4)

    print("KERNEL_OK")
</pallas_src>

<mosaic_0001>
module attributes {stable_mosaic.version = 11 : i64} {
  func.func @_linear_kernel(%arg0: i32, %arg1: memref<16x111xf32, #tpu.memory_space<vmem>>, %arg2: memref<111x24xf32, #tpu.memory_space<vmem>>, %arg3: memref<1x24xf32, #tpu.memory_space<vmem>>, %arg4: memref<16x24xf32, #tpu.memory_space<vmem>>) attributes {dimension_semantics = [#tpu.dimension_semantics<parallel>], iteration_bounds = array<i64: 1>, scalar_prefetch = 0 : i64, scratch_operands = 0 : i64, tpu.core_type = #tpu.core_type<tc>, window_params = [{transform_indices = @transform_0, window_bounds = array<i64: 16, 111>}, {pipeline_mode = #tpu.pipeline_mode<synchronous>, transform_indices = @transform_1, window_bounds = array<i64: 111, 24>}, {pipeline_mode = #tpu.pipeline_mode<synchronous>, transform_indices = @transform_2, window_bounds = array<i64: 1, 24>}, {transform_indices = @transform_3, window_bounds = array<i64: 16, 24>}]} {
    %c0 = arith.constant 0 : index
    %c0_0 = arith.constant 0 : index
    %0 = vector.load %arg1[%c0, %c0_0] : memref<16x111xf32, #tpu.memory_space<vmem>>, vector<16x111xf32>
    %c0_1 = arith.constant 0 : index
    %c0_2 = arith.constant 0 : index
    %1 = vector.load %arg2[%c0_1, %c0_2] : memref<111x24xf32, #tpu.memory_space<vmem>>, vector<111x24xf32>
    %cst = arith.constant dense<0.000000e+00> : vector<16x24xf32>
    %2 = tpu.matmul %0, %1, %cst {dimension_numbers = #tpu.dot_dimension_numbers<[1], [0], [0], [1], [0, 0, 1, 1], [], []>} : vector<16x111xf32>, vector<111x24xf32>, vector<16x24xf32> -> vector<16x24xf32>
    %c0_3 = arith.constant 0 : index
    %c0_4 = arith.constant 0 : index
    %3 = vector.load %arg3[%c0_3, %c0_4] : memref<1x24xf32, #tpu.memory_space<vmem>>, vector<1x24xf32>
    %4 = vector.broadcast %3 : vector<1x24xf32> to vector<16x24xf32>
    %5 = arith.addf %2, %4 : vector<16x24xf32>
    %c0_5 = arith.constant 0 : index
    %c0_6 = arith.constant 0 : index
    %6 = vector.load %arg4[%c0_5, %c0_6] : memref<16x24xf32, #tpu.memory_space<vmem>>, vector<16x24xf32>
    tpu.vector_store %arg4[%c0_5, %c0_6], %5 {strides = array<i32>} : memref<16x24xf32, #tpu.memory_space<vmem>>, vector<16x24xf32>,
    return
  }
  func.func @transform_0(%arg0: i32) -> (i32, i32) {
    %c0_i32 = arith.constant 0 : i32
    %c0_i32_0 = arith.constant 0 : i32
    return %arg0, %c0_i32 : i32, i32
  }
  func.func @transform_1(%arg0: i32) -> (i32, i32) {
    %c0_i32 = arith.constant 0 : i32
    %c0_i32_0 = arith.constant 0 : i32
    %c0_i32_1 = arith.constant 0 : i32
    return %c0_i32, %c0_i32_0 : i32, i32
  }
  func.func @transform_2(%arg0: i32) -> (i32, i32) {
    %c0_i32 = arith.constant 0 : i32
    %c0_i32_0 = arith.constant 0 : i32
    %c0_i32_1 = arith.constant 0 : i32
    return %c0_i32, %c0_i32_0 : i32, i32
  }
  func.func @transform_3(%arg0: i32) -> (i32, i32) {
    %c0_i32 = arith.constant 0 : i32
    %c0_i32_0 = arith.constant 0 : i32
    return %arg0, %c0_i32 : i32, i32
  }
}

</mosaic_0001>

<llo_original>
// kernel: tpu_custom_call.1
$region0: #{tpu_custom_call.1}
  #allocation0 [shape = 'u32[]', space=smem, size = 0x4, offset = 0x4, fixed_abs, tag = 'smem constant byte address 0x4 - core index']
  #allocation1 [shape = 'u32[144,128]{1,0:T(1,128)}', space=vmem, size = 0x12000, scoped, tag = 'internal scratch']
  %s0 = inlined_call_operand.vmem [shape: f32[16,111], index: 0, kind: input, shape index: {}]
  %s1 = inlined_call_operand.vmem [shape: f32[111,24], index: 1, kind: input, shape index: {}]
  %s2 = inlined_call_operand.vmem [shape: f32[1,24], index: 2, kind: input, shape index: {}]
  %s3 = inlined_call_operand.hbm [shape: f32[16,24], index: 3, kind: output, shape index: {}]
  %s4 = sld [smem:[#allocation0]]
  $region22: #{tpu_custom_call.1} parent=0
    _
  %s6 = ssub.s32 1, %s4
  %s7 = scalar_select 0, %s6, %s4
  $region1: #{tpu_custom_call.1} parent=0
    #allocation2 [shape = 'u8[8192]{0}', space=vmem, size = 0x2000, scoped, tag = 'output window, operand 0, single buffered']
    #allocation3 [shape = 's32[1]{0}', space=sflag, size = 0x4, scoped, tag = 'scoped memory for tpu_custom_call.1']
    %8 = vsyncpa [#allocation3], 0
    // Predicated region
    $region2: #{tpu_custom_call.1} parent=1 // pred_check
      _
    $region3: #{tpu_custom_call.1} parent=1 // pred_check_branch
      %10 = sbr.rel (0) target = $region5
    $region4: #{tpu_custom_call.1} parent=1 // pred_region
      _
    $region5: #{tpu_custom_call.1} parent=1 // pred_fallthru
      _
    // Predicated region
    $region6: #{tpu_custom_call.1} parent=1 // pred_check
      _
    $region7: #{tpu_custom_call.1} parent=1 // pred_check_branch
      %12 = sbr.rel (0) target = $region9
    $region8: #{tpu_custom_call.1} parent=1 // pred_region
      _
    $region9: #{tpu_custom_call.1} parent=1 // pred_fallthru
      _
    // Predicated region
    $region10: #{tpu_custom_call.1} parent=1 // pred_check
      _
    $region11: #{tpu_custom_call.1} parent=1 // pred_check_branch
      %14 = sbr.rel (0) target = $region13
    $region12: #{tpu_custom_call.1} parent=1 // pred_region
      _
    $region13: #{tpu_custom_call.1} parent=1 // pred_fallthru
      _
    %v15 = vld [vmem:[%s0] sm:$0xff]
    %v16 = vld [vmem:[%s0 + $0x8] sm:$0xff]
    %v17 = vld [vmem:[%s1] sm:$0xff]
    %v18 = vld [vmem:[%s1 + $0x8] sm:$0xff]
    %v19 = vld [vmem:[%s1 + $0x10] sm:$0xff]
    %v20 = vld [vmem:[%s1 + $0x18] sm:$0xff]
    %v21 = vld [vmem:[%s1 + $0x20] sm:$0xff]
    %v22 = vld [vmem:[%s1 + $0x28] sm:$0xff]
    %v23 = vld [vmem:[%s1 + $0x30] sm:$0xff]
    %v24 = vld [vmem:[%s1 + $0x38] sm:$0xff]
    %v25 = vld [vmem:[%s1 + $0x40] sm:$0xff]
    %v26 = vld [vmem:[%s1 + $0x48] sm:$0xff]
    %v27 = vld [vmem:[%s1 + $0x50] sm:$0xff]
    %v28 = vld [vmem:[%s1 + $0x58] sm:$0xff]
    %v29 = vld [vmem:[%s1 + $0x60] sm:$0xff]
    %v30 = vld [vmem:[%s1 + $0x68] sm:$0x7f]
    %v31 = vld [vmem:[%s2] sm:$0x1]
    %v33 = vlaneseq
    %v34 = vshrl.u32 %v33, 7
    %v35 = vsub.s32 0, %v34
    %v36 = vrot.slane %v31, %v35
    %vm38 = vcmask 908288
    %v40 = vsel %vm38, %v15, 0
    %v43 = vsel %vm38, %v16, 0
    %vm45 = vcmask 1046528
    %v47 = vsel %vm45, %v30, 0
    %49 = vmatprep.subr.mxu0 0.0
    %50 = vmatpush1.msra.mxu0 0.0
    %51 = vmatprep.subr.mxu0 0.0
    %52 = vmatpush1.msra.mxu0 0.0
    %53 = vmatprep.subr.mxu0 0.0
    %54 = vmatpush1.msra.mxu0 %v47
    %55 = vmatprep.subr.mxu0 0.0
    %56 = vmatpush1.msra.mxu0 %v29
    %57 = vmatprep.subr.mxu0 0.0
    %58 = vmatpush1.msra.mxu0 %v28
    %59 = vmatprep.subr.mxu0 0.0
    %60 = vmatpush1.msra.mxu0 %v27
    %61 = vmatprep.subr.mxu0 0.0
    %62 = vmatpush1.msra.mxu0 %v26
    %63 = vmatprep.subr.mxu0 0.0
    %64 = vmatpush1.msra.mxu0 %v25
    %65 = vmatprep.subr.mxu0 0.0
    %66 = vmatpush1.msra.mxu0 %v24
    %67 = vmatprep.subr.mxu0 0.0
    %68 = vmatpush1.msra.mxu0 %v23
    %69 = vmatprep.subr.mxu0 0.0
    %70 = vmatpush1.msra.mxu0 %v22
    %71 = vmatprep.subr.mxu0 0.0
    %72 = vmatpush1.msra.mxu0 %v21
    %73 = vmatprep.subr.mxu0 0.0
    %74 = vmatpush1.msra.mxu0 %v20
    %75 = vmatprep.subr.mxu0 0.0
    %76 = vmatpush1.msra.mxu0 %v19
    %77 = vmatprep.subr.mxu0 0.0
    %78 = vmatpush1.msra.mxu0 %v18
    %79 = vmatprep.subr.mxu0 0.0
    %80 = vmatpush1.msra.mxu0 %v17
    %81 = vmatprep.subr.mxu0 0.0
    %82 = vmatpush2.msra.mxu0 0.0
    %83 = vmatprep.subr.mxu0 0.0
    %84 = vmatpush2.msra.mxu0 0.0
    %85 = vmatprep.subr.mxu0 0.0
    %86 = vmatpush2.msra.mxu0 0.0
    %87 = vmatprep.subr.mxu0 0.0
    %88 = vmatpush2.msra.mxu0 0.0
    %89 = vmatprep.subr.mxu0 0.0
    %90 = vmatpush2.msra.mxu0 0.0
    %91 = vmatprep.subr.mxu0 0.0
    %92 = vmatpush2.msra.mxu0 0.0
    %93 = vmatprep.subr.mxu0 0.0
    %94 = vmatpush2.msra.mxu0 0.0
    %95 = vmatprep.subr.mxu0 0.0
    %96 = vmatpush2.msra.mxu0 0.0
    %97 = vmatprep.subr.mxu0 0.0
    %98 = vmatpush2.msra.mxu0 0.0
    %99 = vmatprep.subr.mxu0 0.0
    %100 = vmatpush2.msra.mxu0 0.0
    %101 = vmatprep.subr.mxu0 0.0
    %102 = vmatpush2.msra.mxu0 0.0
    %103 = vmatprep.subr.mxu0 0.0
    %104 = vmatpush2.msra.mxu0 0.0
    %105 = vmatprep.subr.mxu0 0.0
    %106 = vmatpush2.msra.mxu0 0.0
    %107 = vmatprep.subr.mxu0 0.0
    %108 = vmatpush2.msra.mxu0 0.0
    %109 = vmatprep.subr.mxu0 0.0
    %110 = vmatpush2.msra.mxu0 0.0
    %111 = vmatprep.subr.mxu0 0.0
    %112 = vmatpush2.msra.mxu0 0.0
    %113 = vmatprep.mubr.f32.mxu0 0.0
    %114 = vmatmul.mubr.f32.gmra.mxu0 %v40
    %v115 = vpop.f32.mrf.mxu0
    %v116 = vadd.f32 %v36, %v115
    %v117 = vpop.f32.mrf.mxu0
    %118 = vmatprep.mubr.f32.mxu0 0.0
    %119 = vmatmul.mubr.f32.gmra.mxu0 %v43
    %v120 = vpop.f32.mrf.mxu0
    %v121 = vadd.f32 %v36, %v120
    %v122 = vpop.f32.mrf.mxu0
    %123 = vdwg.mxu0
    %vm124 = vcmask 195584
    %125 = vst.msk [vmem:[#allocation2] sm:$0xff] %vm124, %v116
    %126 = vst.msk [vmem:[#allocation2 + $0x8] sm:$0xff] %vm124, %v121
    // Predicated region
    $region14: #{tpu_custom_call.1} parent=1 // pred_check
      _
    $region15: #{tpu_custom_call.1} parent=1 // pred_check_branch
      %128 = sbr.rel (0) target = $region17
    $region16: #{tpu_custom_call.1} parent=1 // pred_region
      %s130 = ssub.s32 256, 256
      %131 = vsyncadd [#allocation3], %s130
      %s132 = sshll.u32 [#allocation2], 4
      %s133 = int_to_ptr.vmem [resolvable:$true] %s132
      %138 = dma.vmem_to_hbm [thread:$0]  %s133, 256, %s3, [#allocation3], 128, 128, 8
    $region17: #{tpu_custom_call.1} parent=1 // pred_fallthru
      _
    // Predicated region
    $region18: #{tpu_custom_call.1} parent=1 // pred_check
      _
    $region19: #{tpu_custom_call.1} parent=1 // pred_check_branch
      %140 = sbr.rel (0) target = $region21
    $region20: #{tpu_custom_call.1} parent=1 // pred_region
      %141 = dma.done [#allocation3], 256
    $region21: #{tpu_custom_call.1} parent=1 // pred_fallthru
      _
    %142 = vsyncpa [#allocation3], 1

</llo_original>
